<compile_context>
chip_gen: v7x
topology: tpu7x:2x2x1
jax: 0.10.0
libtpu: 0.0.40
codegen_flags: <defaults>
</compile_context>

<pallas_src>
import functools

import jax
import jax.numpy as jnp
from jax.experimental import pallas as pl
from jax.experimental.pallas import tpu as pltpu


def _round_up(v, m):
    return ((v + m - 1) // m) * m


def _vmem_limit_bytes():
    """Generation-dependent scoped-VMEM limit."""
    try:
        cap = int(pltpu.get_tpu_info().vmem_capacity_bytes)
    except Exception:
        cap = 64 * 1024 * 1024            # conservative (v7x-sized) fallback
    # ~48 MiB on v7x (64 MiB physical), ~96 MiB on v5e/v6e (128 MiB physical).
    return min((cap * 3) // 4, 100 * 1024 * 1024)


def _largest_tile(total, cap):
    """Largest multiple-of-128 divisor of `total` (itself a multiple of 128) <= cap."""
    cap = max(128, min(cap, total))
    m = total // 128
    best, d = 1, 1
    while d * d <= m:
        if m % d == 0:
            for c in (d, m // d):
                if c * 128 <= cap and c > best:
                    best = c
        d += 1
    return best * 128


# ---------------------------------------------------------------------------
# Kernel 1: projection  h = x @ W^T + b   (bf16 operands, f32 accumulate)
# ---------------------------------------------------------------------------
def proj_kernel(x_ref, w_ref, b_ref, h_ref):
    acc = jnp.dot(x_ref[...], w_ref[...], preferred_element_type=jnp.float32)
    acc = acc + b_ref[...]                       # bias broadcast in f32
    # dropout: identity (eval mode)
    h_ref[...] = acc.astype(h_ref.dtype)         # bf16 for the next matmul


# ---------------------------------------------------------------------------
# Kernel 2: aggregation  out = relu(adj @ h + x)
#   grid = (row tiles, contraction tiles); f32 accumulator in VMEM scratch.
#   If h is VMEM-resident (full array, constant index_map), slice it in-kernel.
# ---------------------------------------------------------------------------
def agg_kernel(adj_ref, h_ref, xres_ref, o_ref, acc_ref, *, tk, h_resident):
    k = pl.program_id(1)

    @pl.when(k == 0)
    def _():
        acc_ref[...] = jnp.zeros_like(acc_ref)

    if h_resident:
        start = pl.multiple_of(k * tk, 128)
        h_blk = h_ref[pl.ds(start, tk), :]
    else:
        h_blk = h_ref[...]

    acc_ref[...] += jnp.dot(adj_ref[...], h_blk,
                            preferred_element_type=jnp.float32)

    @pl.when(k == pl.num_programs(1) - 1)
    def _():
        res = acc_ref[...] + xres_ref[...].astype(jnp.float32)  # residual in f32
        o_ref[...] = jnp.maximum(res, 0.0).astype(o_ref.dtype)


# ---------------------------------------------------------------------------
# pallas_call wrappers
# ---------------------------------------------------------------------------
def _run_proj(x_b, w_b, b_f, Np, Fp, tm, vmem_limit):
    # TODO(synk): for very large Fp, tile the Fp contraction so the resident W
    # block stays under the v7x VMEM budget; unnecessary at these sizes.
    return pl.pallas_call(
        proj_kernel,
        out_shape=jax.ShapeDtypeStruct((Np, Fp), jnp.bfloat16),
        grid_spec=pltpu.PrefetchScalarGridSpec(
            num_scalar_prefetch=0,
            grid=(Np // tm,),
            in_specs=[
                pl.BlockSpec((tm, Fp), lambda i: (i, 0)),
                pl.BlockSpec((Fp, Fp), lambda i: (0, 0)),   # grid-invariant W
                pl.BlockSpec((1, Fp), lambda i: (0, 0)),    # grid-invariant b
            ],
            out_specs=pl.BlockSpec((tm, Fp), lambda i: (i, 0)),
        ),
        compiler_params=pltpu.CompilerParams(
            dimension_semantics=("parallel",),
            vmem_limit_bytes=vmem_limit),
    )(x_b, w_b, b_f)


def _run_agg(adj_b, h, xres_b, out_dtype, Np, Fp, tm, tk, h_resident,
             vmem_limit, adj_buffers):
    if adj_buffers is None:
        adj_spec = pl.BlockSpec((tm, tk), lambda i, k: (i, k))
    else:
        adj_spec = pl.BlockSpec((tm, tk), lambda i, k: (i, k),
                                pipeline_mode=pl.Buffered(adj_buffers))
    if h_resident:
        h_spec = pl.BlockSpec((Np, Fp), lambda i, k: (0, 0))  # DMA'd once
    else:
        h_spec = pl.BlockSpec((tk, Fp), lambda i, k: (k, 0))
    kernel = functools.partial(agg_kernel, tk=tk, h_resident=h_resident)
    return pl.pallas_call(
        kernel,
        out_shape=jax.ShapeDtypeStruct((Np, Fp), out_dtype),
        grid_spec=pltpu.PrefetchScalarGridSpec(
            num_scalar_prefetch=0,
            grid=(Np // tm, Np // tk),
            in_specs=[
                adj_spec,                                       # adj stream
                h_spec,                                         # h (resident/streamed)
                pl.BlockSpec((tm, Fp), lambda i, k: (i, 0)),    # residual (bf16)
            ],
            out_specs=pl.BlockSpec((tm, Fp), lambda i, k: (i, 0)),
            scratch_shapes=[pltpu.VMEM((tm, Fp), jnp.float32)],
        ),
        compiler_params=pltpu.CompilerParams(
            dimension_semantics=("parallel", "arbitrary"),
            vmem_limit_bytes=vmem_limit),
    )(adj_b, h, xres_b)


def gcn_layer(x, adj, w_t, b, *, tm_cap=1024, tk_cap=2048):
    """x: [N, F], adj: [N, N], w_t: [F_in, F_out], b: [F_out] -> [N, F_out]."""
    N, F_in = x.shape
    F_in2, F_out = w_t.shape
    assert F_in == F_in2
    assert F_out == F_in, "residual (h + x) requires out_feature == in_feature"
    assert adj.shape == (N, N)

    f32, bf16 = jnp.float32, jnp.bfloat16
    out_dtype = x.dtype

    # Lane-dense feature dim; node dim padded only to 128.
    Fp = _round_up(F_out, 128)
    Np = _round_up(N, 128)
    pad_n, pad_f = Np - N, Fp - F_in

    vmem_limit = _vmem_limit_bytes()
    budget = (vmem_limit * 4) // 5

    # ---- operand prep (skip pad/cast passes when already aligned / bf16) ---
    x_b = x if x.dtype == bf16 else x.astype(bf16)
    if pad_n or pad_f:
        x_b = jnp.pad(x_b, ((0, pad_n), (0, pad_f)))
    adj_b = adj if adj.dtype == bf16 else adj.astype(bf16)
    if pad_n:
        adj_b = jnp.pad(adj_b, ((0, pad_n), (0, pad_n)))
    # TODO(synk): on v7x, adj could be streamed as fp8 (e4m3) to halve the
    # dominant HBM stream; kept bf16 here for cross-generation numerics.
    w_b = jnp.pad(w_t.astype(bf16), ((0, Fp - F_in), (0, Fp - F_out)))
    b_f = jnp.pad(b.astype(f32), (0, Fp - F_out)).reshape(1, Fp)

    # ---- tile selection (tiles always divide Np exactly) -------------------
    tm_lim = tm_cap
    if Np >= 256:
        tm_lim = min(tm_lim, Np // 2)    # >=2 row tiles -> both v7x TCs busy
    tm = _largest_tile(Np, tm_lim)
    tk = _largest_tile(Np, tk_cap)

    h_bytes = Np * Fp * 2                # h kept in bf16 between the two calls
    h_resident = 2 * h_bytes <= min(budget // 3, 16 * 1024 * 1024)

    def agg_footprint(tm_, tk_):
        f = 3 * tm_ * tk_ * 2                                   # adj (3 bufs)
        f += 2 * h_bytes if h_resident else 2 * tk_ * Fp * 2    # h
        f += 2 * tm_ * Fp * 2                                   # residual bf16
        f += 2 * tm_ * Fp * 4                                   # output f32
        f += tm_ * Fp * 4                                       # accumulator
        return f

    while agg_footprint(tm, tk) > budget and tk > 128:
        tk = _largest_tile(Np, tk - 128)
    while agg_footprint(tm, tk) > budget and tm > 128:
        tm = _largest_tile(Np, tm - 128)
    assert Np % tm == 0 and Np % tk == 0

    # ---- projection: h = x @ W^T + b  (computed once, kept in bf16) --------
    tm_p = _largest_tile(Np, 512)
    h = _run_proj(x_b, w_b, b_f, Np, Fp, tm_p, vmem_limit)

    # ---- aggregation: out = relu(adj @ h + x) -------------------------------
    try:
        out_pad = _run_agg(adj_b, h, x_b, out_dtype, Np, Fp, tm, tk,
                           h_resident, vmem_limit, adj_buffers=3)
        out_pad = jax.block_until_ready(out_pad)
    except Exception:
        # Runtime without Buffered(3) support: fall back to default pipelining.
        out_pad = _run_agg(adj_b, h, x_b, out_dtype, Np, Fp, tm, tk,
                           h_resident, vmem_limit, adj_buffers=None)

    if pad_n or pad_f:
        return out_pad[:N, :F_out]
    return out_pad


# ---------------------------------------------------------------------------
# References
# ---------------------------------------------------------------------------
def gcn_reference_f32(x, adj, w_t, b):
    h = x @ w_t + b
    h = adj @ h
    return jnp.maximum(h + x, 0.0)


def gcn_reference_bf16(x, adj, w_t, b):
    # Mirrors the kernel's bf16 quantization of the matmul operands, the bf16
    # intermediate h, and the bf16-streamed residual.
    hp = jax.lax.Precision.HIGHEST
    xq = x.astype(jnp.bfloat16).astype(jnp.float32)
    wq = w_t.astype(jnp.bfloat16).astype(jnp.float32)
    aq = adj.astype(jnp.bfloat16).astype(jnp.float32)
    h = jnp.dot(xq, wq, precision=hp) + b
    hq = h.astype(jnp.bfloat16).astype(jnp.float32)
    h = jnp.dot(aq, hq, precision=hp)
    return jnp.maximum(h + xq, 0.0)


def _make_inputs(key, N, F):
    k_x, k_adj, k_w, k_b = jax.random.split(key, 4)
    x = jax.random.normal(k_x, (N, F), dtype=jnp.float32)
    # symmetric row-normalized adjacency (with self loops), deterministic
    a = (jax.random.uniform(k_adj, (N, N)) > 0.5).astype(jnp.float32)
    a = jnp.maximum(a, a.T) + jnp.eye(N, dtype=jnp.float32)
    adj = a / jnp.sum(a, axis=1, keepdims=True)
    # nn.Linear(in_feature, out_feature): weight [out, in], bias [out]
    bound = 1.0 / jnp.sqrt(jnp.float32(F))
    w = jax.random.uniform(k_w, (F, F), minval=-bound, maxval=bound,
                           dtype=jnp.float32)          # [out, in]
    b = jax.random.uniform(k_b, (F,), minval=-bound, maxval=bound,
                           dtype=jnp.float32)
    return x, adj, w.T, b                              # w_t = [in, out]


if __name__ == "__main__":
    key = jax.random.PRNGKey(0)
    k1, k2 = jax.random.split(key)

    # Case 1: tiny, unaligned shapes (exercises the 128-pad path).
    x, adj, w_t, b = _make_inputs(k1, 16, 32)
    out = jax.block_until_ready(gcn_layer(x, adj, w_t, b))
    assert out.shape == (16, 32)
    assert jnp.allclose(out, gcn_reference_bf16(x, adj, w_t, b),
                        atol=5e-3, rtol=5e-3), "case1: mismatch vs bf16 ref"
    assert jnp.allclose(out, gcn_reference_f32(x, adj, w_t, b),
                        atol=3e-2, rtol=3e-2), "case1: mismatch vs f32 ref"

    # Case 2: aligned shapes with forced small tiles (exercises the no-pad
    # path, multi-row-tile grid, resident-h k-slicing and k accumulation).
    x, adj, w_t, b = _make_inputs(k2, 256, 128)
    out = jax.block_until_ready(gcn_layer(x, adj, w_t, b,
                                          tm_cap=128, tk_cap=128))
    assert out.shape == (256, 128)
    assert jnp.allclose(out, gcn_reference_bf16(x, adj, w_t, b),
                        atol=5e-3, rtol=5e-3), "case2: mismatch vs bf16 ref"
    assert jnp.allclose(out, gcn_reference_f32(x, adj, w_t, b),
                        atol=3e-2, rtol=3e-2), "case2: mismatch vs f32 ref"

    print("KERNEL_OK")
</pallas_src>

<mosaic_0001>
module attributes {stable_mosaic.version = 11 : i64} {
  func.func @proj_kernel(%arg0: i32, %arg1: memref<128x128xbf16, #tpu.memory_space<vmem>>, %arg2: memref<128x128xbf16, #tpu.memory_space<vmem>>, %arg3: memref<1x128xf32, #tpu.memory_space<vmem>>, %arg4: memref<128x128xbf16, #tpu.memory_space<vmem>>) attributes {dimension_semantics = [#tpu.dimension_semantics<parallel>], iteration_bounds = array<i64: 1>, scalar_prefetch = 0 : i64, scratch_operands = 0 : i64, tpu.core_type = #tpu.core_type<tc>, window_params = [{transform_indices = @transform_0, window_bounds = array<i64: 128, 128>}, {pipeline_mode = #tpu.pipeline_mode<synchronous>, transform_indices = @transform_1, window_bounds = array<i64: 128, 128>}, {pipeline_mode = #tpu.pipeline_mode<synchronous>, transform_indices = @transform_2, window_bounds = array<i64: 1, 128>}, {transform_indices = @transform_3, window_bounds = array<i64: 128, 128>}]} {
    %c0 = arith.constant 0 : index
    %c0_0 = arith.constant 0 : index
    %0 = vector.load %arg1[%c0, %c0_0] : memref<128x128xbf16, #tpu.memory_space<vmem>>, vector<128x128xbf16>
    %c0_1 = arith.constant 0 : index
    %c0_2 = arith.constant 0 : index
    %1 = vector.load %arg2[%c0_1, %c0_2] : memref<128x128xbf16, #tpu.memory_space<vmem>>, vector<128x128xbf16>
    %cst = arith.constant dense<0.000000e+00> : vector<128x128xf32>
    %2 = tpu.matmul %0, %1, %cst {dimension_numbers = #tpu.dot_dimension_numbers<[1], [0], [0], [1], [0, 0, 1, 1], [], []>} : vector<128x128xbf16>, vector<128x128xbf16>, vector<128x128xf32> -> vector<128x128xf32>
    %c0_3 = arith.constant 0 : index
    %c0_4 = arith.constant 0 : index
    %3 = vector.load %arg3[%c0_3, %c0_4] : memref<1x128xf32, #tpu.memory_space<vmem>>, vector<1x128xf32>
    %4 = vector.broadcast %3 : vector<1x128xf32> to vector<128x128xf32>
    %5 = arith.addf %2, %4 : vector<128x128xf32>
    %6 = arith.truncf %5 : vector<128x128xf32> to vector<128x128xbf16>
    %c0_5 = arith.constant 0 : index
    %c0_6 = arith.constant 0 : index
    %7 = vector.load %arg4[%c0_5, %c0_6] : memref<128x128xbf16, #tpu.memory_space<vmem>>, vector<128x128xbf16>
    tpu.vector_store %arg4[%c0_5, %c0_6], %6 {strides = array<i32>} : memref<128x128xbf16, #tpu.memory_space<vmem>>, vector<128x128xbf16>,
    return
  }
  func.func @transform_0(%arg0: i32) -> (i32, i32) {
    %c0_i32 = arith.constant 0 : i32
    %c0_i32_0 = arith.constant 0 : i32
    return %arg0, %c0_i32 : i32, i32
  }
  func.func @transform_1(%arg0: i32) -> (i32, i32) {
    %c0_i32 = arith.constant 0 : i32
    %c0_i32_0 = arith.constant 0 : i32
    %c0_i32_1 = arith.constant 0 : i32
    return %c0_i32, %c0_i32_0 : i32, i32
  }
  func.func @transform_2(%arg0: i32) -> (i32, i32) {
    %c0_i32 = arith.constant 0 : i32
    %c0_i32_0 = arith.constant 0 : i32
    %c0_i32_1 = arith.constant 0 : i32
    return %c0_i32, %c0_i32_0 : i32, i32
  }
  func.func @transform_3(%arg0: i32) -> (i32, i32) {
    %c0_i32 = arith.constant 0 : i32
    %c0_i32_0 = arith.constant 0 : i32
    return %arg0, %c0_i32 : i32, i32
  }
}

</mosaic_0001>

<llo_original>
// kernel: tpu_custom_call.1
$region0: #{tpu_custom_call.1}
  #allocation0 [shape = 'u32[]', space=smem, size = 0x4, offset = 0x4, fixed_abs, tag = 'smem constant byte address 0x4 - core index']
  #allocation1 [shape = 'u32[144,128]{1,0:T(1,128)}', space=vmem, size = 0x12000, scoped, tag = 'internal scratch']
  %s0 = inlined_call_operand.hbm [shape: bf16[128,128], index: 0, kind: input, shape index: {}]
  %s1 = inlined_call_operand.hbm [shape: bf16[128,128], index: 1, kind: input, shape index: {}]
  %s2 = inlined_call_operand.vmem [shape: f32[1,128], index: 2, kind: input, shape index: {}]
  %s3 = inlined_call_operand.hbm [shape: bf16[128,128], index: 3, kind: output, shape index: {}]
  %s4 = sld [smem:[#allocation0]]
  $region30: #{tpu_custom_call.1} parent=0
    _
  %s6 = ssub.s32 1, %s4
  %s7 = scalar_select 0, %s6, %s4
  $region1: #{tpu_custom_call.1} parent=0
    #allocation2 [shape = 'u8[32768]{0}', space=vmem, size = 0x8000, scoped, tag = 'input window, operand 0, single buffered']
    #allocation3 [shape = 's32[1]{0}', space=sflag, size = 0x4, scoped, tag = 'scoped memory for tpu_custom_call.1']
    #allocation4 [shape = 's32[1]{0}', space=sflag, size = 0x4, scoped, tag = 'scoped memory for tpu_custom_call.1']
    #allocation5 [shape = 'u8[32768]{0}', space=vmem, size = 0x8000, scoped, tag = 'input window, operand 1, single buffered']
    #allocation6 [shape = 's32[1]{0}', space=sflag, size = 0x4, scoped, tag = 'scoped memory for tpu_custom_call.1']
    #allocation7 [shape = 'u8[32768]{0}', space=vmem, size = 0x8000, scoped, tag = 'output window, operand 0, single buffered']
    %8 = vsyncpa [#allocation3], 0
    %9 = vsyncpa [#allocation6], 0
    %10 = vsyncpa [#allocation4], 0
    // Predicated region
    $region2: #{tpu_custom_call.1} parent=1 // pred_check
      _
    $region3: #{tpu_custom_call.1} parent=1 // pred_check_branch
      %12 = sbr.rel (0) target = $region5
    $region4: #{tpu_custom_call.1} parent=1 // pred_region
      %s14 = ssub.s32 1024, 1024
      %15 = vsyncadd [#allocation3], %s14
      %s16 = sshll.u32 [#allocation2], 4
      %s17 = int_to_ptr.vmem [resolvable:$true] %s16
      %22 = dma.hbm_to_vmem [thread:$0]  %s0, 1024, %s17, [#allocation3], 64, 64, 4
    $region5: #{tpu_custom_call.1} parent=1 // pred_fallthru
      _
    // Predicated region
    $region6: #{tpu_custom_call.1} parent=1 // pred_check
      _
    $region7: #{tpu_custom_call.1} parent=1 // pred_check_branch
      %24 = sbr.rel (0) target = $region9
    $region8: #{tpu_custom_call.1} parent=1 // pred_region
      %s26 = ssub.s32 1024, 1024
      %27 = vsyncadd [#allocation6], %s26
      %s28 = sshll.u32 [#allocation5], 4
      %s29 = int_to_ptr.vmem [resolvable:$true] %s28
      %34 = dma.hbm_to_vmem [thread:$0]  %s1, 1024, %s29, [#allocation6], 64, 64, 4
    $region9: #{tpu_custom_call.1} parent=1 // pred_fallthru
      _
    // Predicated region
    $region10: #{tpu_custom_call.1} parent=1 // pred_check
      _
    $region11: #{tpu_custom_call.1} parent=1 // pred_check_branch
      %36 = sbr.rel (0) target = $region13
    $region12: #{tpu_custom_call.1} parent=1 // pred_region
      _
    $region13: #{tpu_custom_call.1} parent=1 // pred_fallthru
      _
    // Predicated region
    $region14: #{tpu_custom_call.1} parent=1 // pred_check
      _
    $region15: #{tpu_custom_call.1} parent=1 // pred_check_branch
      %38 = sbr.rel (0) target = $region17
    $region16: #{tpu_custom_call.1} parent=1 // pred_region
      %39 = dma.done [#allocation3], 1024
    $region17: #{tpu_custom_call.1} parent=1 // pred_fallthru
      _
    // Predicated region
    $region18: #{tpu_custom_call.1} parent=1 // pred_check
      _
    $region19: #{tpu_custom_call.1} parent=1 // pred_check_branch
      %41 = sbr.rel (0) target = $region21
    $region20: #{tpu_custom_call.1} parent=1 // pred_region
      %42 = dma.done [#allocation6], 1024
    $region21: #{tpu_custom_call.1} parent=1 // pred_fallthru
      _
    %v44 = vld [vmem:[#allocation2] sm:$0xf]
    %v45 = vld [vmem:[#allocation2 + $0x4] sm:$0xf]
    %v46 = vld [vmem:[#allocation2 + $0x8] sm:$0xf]
    %v47 = vld [vmem:[#allocation2 + $0xc] sm:$0xf]
    %v48 = vld [vmem:[#allocation2 + $0x10] sm:$0xf]
    %v49 = vld [vmem:[#allocation2 + $0x14] sm:$0xf]
    %v50 = vld [vmem:[#allocation2 + $0x18] sm:$0xf]
    %v51 = vld [vmem:[#allocation2 + $0x1c] sm:$0xf]
    %v52 = vld [vmem:[#allocation2 + $0x20] sm:$0xf]
    %v53 = vld [vmem:[#allocation2 + $0x24] sm:$0xf]
    %v54 = vld [vmem:[#allocation2 + $0x28] sm:$0xf]
    %v55 = vld [vmem:[#allocation2 + $0x2c] sm:$0xf]
    %v56 = vld [vmem:[#allocation2 + $0x30] sm:$0xf]
    %v57 = vld [vmem:[#allocation2 + $0x34] sm:$0xf]
    %v58 = vld [vmem:[#allocation2 + $0x38] sm:$0xf]
    %v59 = vld [vmem:[#allocation2 + $0x3c] sm:$0xf]
    %v60 = vld [vmem:[#allocation5] sm:$0xf]
    %v61 = vld [vmem:[#allocation5 + $0x4] sm:$0xf]
    %v62 = vld [vmem:[#allocation5 + $0x8] sm:$0xf]
    %v63 = vld [vmem:[#allocation5 + $0xc] sm:$0xf]
    %v64 = vld [vmem:[#allocation5 + $0x10] sm:$0xf]
    %v65 = vld [vmem:[#allocation5 + $0x14] sm:$0xf]
    %v66 = vld [vmem:[#allocation5 + $0x18] sm:$0xf]
    %v67 = vld [vmem:[#allocation5 + $0x1c] sm:$0xf]
    %v68 = vld [vmem:[#allocation5 + $0x20] sm:$0xf]
    %v69 = vld [vmem:[#allocation5 + $0x24] sm:$0xf]
    %v70 = vld [vmem:[#allocation5 + $0x28] sm:$0xf]
    %v71 = vld [vmem:[#allocation5 + $0x2c] sm:$0xf]
    %v72 = vld [vmem:[#allocation5 + $0x30] sm:$0xf]
    %v73 = vld [vmem:[#allocation5 + $0x34] sm:$0xf]
    %v74 = vld [vmem:[#allocation5 + $0x38] sm:$0xf]
    %v75 = vld [vmem:[#allocation5 + $0x3c] sm:$0xf]
    %v76 = vld [vmem:[%s2] sm:$0x1]
    %v78 = vlaneseq
    %v79 = vshrl.u32 %v78, 7
    %v80 = vsub.s32 0, %v79
    %v81 = vrot.slane %v76, %v80
    %v99 = vunpack.c.l.b16 %v44
    %v100 = vunpack.c.l.b16 %v45
    %v101 = vunpack.c.l.b16 %v46
    %v102 = vunpack.c.l.b16 %v47
    %v103 = vunpack.c.l.b16 %v48
    %v104 = vunpack.c.l.b16 %v49
    %v105 = vunpack.c.l.b16 %v50
    %v106 = vunpack.c.l.b16 %v51
    %v107 = vunpack.c.l.b16 %v52
    %v108 = vunpack.c.l.b16 %v53
    %v109 = vunpack.c.l.b16 %v54
    %v110 = vunpack.c.l.b16 %v55
    %v111 = vunpack.c.l.b16 %v56
    %v112 = vunpack.c.l.b16 %v57
    %v113 = vunpack.c.l.b16 %v58
    %v114 = vunpack.c.l.b16 %v59
    %v115 = vpack.c.b16 %v100, %v99
    %v116 = vpack.c.b16 %v102, %v101
    %v117 = vpack.c.b16 %v104, %v103
    %v118 = vpack.c.b16 %v106, %v105
    %v119 = vpack.c.b16 %v108, %v107
    %v120 = vpack.c.b16 %v110, %v109
    %v121 = vpack.c.b16 %v112, %v111
    %v122 = vpack.c.b16 %v114, %v113
    %v147 = vunpack.c.l.b16 %v60
    %v148 = vunpack.c.l.b16 %v61
    %v149 = vunpack.c.l.b16 %v62
    %v150 = vunpack.c.l.b16 %v63
    %v151 = vunpack.c.l.b16 %v64
    %v152 = vunpack.c.l.b16 %v65
    %v153 = vunpack.c.l.b16 %v66
    %v154 = vunpack.c.l.b16 %v67
    %v155 = vunpack.c.l.b16 %v68
    %v156 = vunpack.c.l.b16 %v69
    %v157 = vunpack.c.l.b16 %v70
    %v158 = vunpack.c.l.b16 %v71
    %v159 = vunpack.c.l.b16 %v72
    %v160 = vunpack.c.l.b16 %v73
    %v161 = vunpack.c.l.b16 %v74
    %v162 = vunpack.c.l.b16 %v75
    %v163 = vpack.c.b16 %v148, %v147
    %v164 = vpack.c.b16 %v150, %v149
    %v165 = vpack.c.b16 %v152, %v151
    %v166 = vpack.c.b16 %v154, %v153
    %v167 = vpack.c.b16 %v156, %v155
    %v168 = vpack.c.b16 %v158, %v157
    %v169 = vpack.c.b16 %v160, %v159
    %v170 = vpack.c.b16 %v162, %v161
    %179 = vmatprep.subr.bf16.mxu0 0
    %180 = vmatpush1.bf16.msra.mxu0 %v163
    %181 = vmatprep.subr.bf16.mxu0 0
    %182 = vmatpush1.bf16.msra.mxu0 %v164
    %183 = vmatprep.subr.bf16.mxu0 0
    %184 = vmatpush1.bf16.msra.mxu0 %v165
    %185 = vmatprep.subr.bf16.mxu0 0
    %186 = vmatpush1.bf16.msra.mxu0 %v166
    %187 = vmatprep.subr.bf16.mxu0 0
    %188 = vmatpush1.bf16.msra.mxu0 %v167
    %189 = vmatprep.subr.bf16.mxu0 0
    %190 = vmatpush1.bf16.msra.mxu0 %v168
    %191 = vmatprep.subr.bf16.mxu0 0
    %192 = vmatpush1.bf16.msra.mxu0 %v169
    %193 = vmatprep.subr.bf16.mxu0 0
    %194 = vmatpush1.bf16.msra.mxu0 %v170
    %195 = vmatprep.subr.bf16.mxu0 0
    %196 = vmatpush1.bf16.msra.mxu0 0
    %197 = vmatprep.subr.bf16.mxu0 0
    %198 = vmatpush1.bf16.msra.mxu0 0
    %199 = vmatprep.subr.bf16.mxu0 0
    %200 = vmatpush1.bf16.msra.mxu0 0
    %201 = vmatprep.subr.bf16.mxu0 0
    %202 = vmatpush1.bf16.msra.mxu0 0
    %203 = vmatprep.subr.bf16.mxu0 0
    %204 = vmatpush1.bf16.msra.mxu0 0
    %205 = vmatprep.subr.bf16.mxu0 0
    %206 = vmatpush1.bf16.msra.mxu0 0
    %207 = vmatprep.subr.bf16.mxu0 0
    %208 = vmatpush1.bf16.msra.mxu0 0
    %209 = vmatprep.subr.bf16.mxu0 0
    %210 = vmatpush1.bf16.msra.mxu0 0
    %211 = vmatprep.mubr.bf16.mxu0 0
    %212 = vmatmul.mubr.bf16.gmra.mrb[0].mxu0 %v115
    %v213 = vpop.f32.mrb[0].mxu0
    %v214 = vadd.f32 %v81, %v213
    %v215 = vpop.f32.mrb[0].mxu0
    %v216 = vpop.f32.mrb[0].mxu0
    %v217 = vadd.f32 %v81, %v216
    %v218 = vpop.f32.mrb[0].mxu0
    %219 = vmatprep.mubr.bf16.mxu0 0
    %220 = vmatmul.mubr.bf16.gmra.mrb[0].mxu0 %v116
    %v221 = vpop.f32.mrb[0].mxu0
    %v222 = vadd.f32 %v81, %v221
    %v223 = vpop.f32.mrb[0].mxu0
    %v224 = vpop.f32.mrb[0].mxu0
    %v225 = vadd.f32 %v81, %v224
    %v226 = vpop.f32.mrb[0].mxu0
    %227 = vmatprep.mubr.bf16.mxu0 0
    %228 = vmatmul.mubr.bf16.gmra.mrb[0].mxu0 %v117
    %v229 = vpop.f32.mrb[0].mxu0
    %v230 = vadd.f32 %v81, %v229
    %v231 = vpop.f32.mrb[0].mxu0
    %v232 = vpop.f32.mrb[0].mxu0
    %v233 = vadd.f32 %v81, %v232
    %v234 = vpop.f32.mrb[0].mxu0
    %235 = vmatprep.mubr.bf16.mxu0 0
    %236 = vmatmul.mubr.bf16.gmra.mrb[0].mxu0 %v118
    %v237 = vpop.f32.mrb[0].mxu0
    %v238 = vadd.f32 %v81, %v237
    %v239 = vpop.f32.mrb[0].mxu0
    %v240 = vpop.f32.mrb[0].mxu0
    %v241 = vadd.f32 %v81, %v240
    %v242 = vpop.f32.mrb[0].mxu0
    %243 = vmatprep.mubr.bf16.mxu0 0
    %244 = vmatmul.mubr.bf16.gmra.mrb[0].mxu0 %v119
    %v245 = vpop.f32.mrb[0].mxu0
    %v246 = vadd.f32 %v81, %v245
    %v247 = vpop.f32.mrb[0].mxu0
    %v248 = vpop.f32.mrb[0].mxu0
    %v249 = vadd.f32 %v81, %v248
    %v250 = vpop.f32.mrb[0].mxu0
    %251 = vmatprep.mubr.bf16.mxu0 0
    %252 = vmatmul.mubr.bf16.gmra.mrb[0].mxu0 %v120
    %v253 = vpop.f32.mrb[0].mxu0
    %v254 = vadd.f32 %v81, %v253
    %v255 = vpop.f32.mrb[0].mxu0
    %v256 = vpop.f32.mrb[0].mxu0
    %v257 = vadd.f32 %v81, %v256
    %v258 = vpop.f32.mrb[0].mxu0
    %259 = vmatprep.mubr.bf16.mxu0 0
    %260 = vmatmul.mubr.bf16.gmra.mrb[0].mxu0 %v121
    %v261 = vpop.f32.mrb[0].mxu0
    %v262 = vadd.f32 %v81, %v261
    %v263 = vpop.f32.mrb[0].mxu0
    %v264 = vpop.f32.mrb[0].mxu0
    %v265 = vadd.f32 %v81, %v264
    %v266 = vpop.f32.mrb[0].mxu0
    %267 = vmatprep.mubr.bf16.mxu0 0
    %268 = vmatmul.mubr.bf16.gmra.mrb[0].mxu0 %v122
    %v269 = vpop.f32.mrb[0].mxu0
    %v270 = vadd.f32 %v81, %v269
    %v271 = vpop.f32.mrb[0].mxu0
    %v272 = vpop.f32.mrb[0].mxu0
    %v273 = vadd.f32 %v81, %v272
    %v274 = vpop.f32.mrb[0].mxu0
    %275 = vdwg.mxu0
    %v276 = vpack.c.bf16 %v217, %v214
    %v277 = vpack.c.bf16 %v225, %v222
    %v278 = vpack.c.bf16 %v233, %v230
    %v279 = vpack.c.bf16 %v241, %v238
    %v280 = vpack.c.bf16 %v249, %v246
    %v281 = vpack.c.bf16 %v257, %v254
    %v282 = vpack.c.bf16 %v265, %v262
    %v283 = vpack.c.bf16 %v273, %v270
    %v292 = vunpack.c.l.b16 %v276
    %v293 = vunpack.c.h.b16 %v276
    %v294 = vunpack.c.l.b16 %v277
    %v295 = vunpack.c.h.b16 %v277
    %v296 = vunpack.c.l.b16 %v278
    %v297 = vunpack.c.h.b16 %v278
    %v298 = vunpack.c.l.b16 %v279
    %v299 = vunpack.c.h.b16 %v279
    %v300 = vunpack.c.l.b16 %v280
    %v301 = vunpack.c.h.b16 %v280
    %v302 = vunpack.c.l.b16 %v281
    %v303 = vunpack.c.h.b16 %v281
    %v304 = vunpack.c.l.b16 %v282
    %v305 = vunpack.c.h.b16 %v282
    %v306 = vunpack.c.l.b16 %v283
    %v307 = vunpack.c.h.b16 %v283
    %v308 = vpack.c.b16 %v292, %v292
    %v309 = vpack.c.b16 %v293, %v293
    %v310 = vpack.c.b16 %v294, %v294
    %v311 = vpack.c.b16 %v295, %v295
    %v312 = vpack.c.b16 %v296, %v296
    %v313 = vpack.c.b16 %v297, %v297
    %v314 = vpack.c.b16 %v298, %v298
    %v315 = vpack.c.b16 %v299, %v299
    %v316 = vpack.c.b16 %v300, %v300
    %v317 = vpack.c.b16 %v301, %v301
    %v318 = vpack.c.b16 %v302, %v302
    %v319 = vpack.c.b16 %v303, %v303
    %v320 = vpack.c.b16 %v304, %v304
    %v321 = vpack.c.b16 %v305, %v305
    %v322 = vpack.c.b16 %v306, %v306
    %v323 = vpack.c.b16 %v307, %v307
    %340 = vst [vmem:[#allocation7] sm:$0xf] %v308
    %341 = vst [vmem:[#allocation7 + $0x4] sm:$0xf] %v309
    %342 = vst [vmem:[#allocation7 + $0x8] sm:$0xf] %v310
    %343 = vst [vmem:[#allocation7 + $0xc] sm:$0xf] %v311
    %344 = vst [vmem:[#allocation7 + $0x10] sm:$0xf] %v312
    %345 = vst [vmem:[#allocation7 + $0x14] sm:$0xf] %v313
    %346 = vst [vmem:[#allocation7 + $0x18] sm:$0xf] %v314
    %347 = vst [vmem:[#allocation7 + $0x1c] sm:$0xf] %v315
    %348 = vst [vmem:[#allocation7 + $0x20] sm:$0xf] %v316
    %349 = vst [vmem:[#allocation7 + $0x24] sm:$0xf] %v317
    %350 = vst [vmem:[#allocation7 + $0x28] sm:$0xf] %v318
    %351 = vst [vmem:[#allocation7 + $0x2c] sm:$0xf] %v319
    %352 = vst [vmem:[#allocation7 + $0x30] sm:$0xf] %v320
    %353 = vst [vmem:[#allocation7 + $0x34] sm:$0xf] %v321
    %354 = vst [vmem:[#allocation7 + $0x38] sm:$0xf] %v322
    %355 = vst [vmem:[#allocation7 + $0x3c] sm:$0xf] %v323
    // Predicated region
    $region22: #{tpu_custom_call.1} parent=1 // pred_check
      _
    $region23: #{tpu_custom_call.1} parent=1 // pred_check_branch
      %357 = sbr.rel (0) target = $region25
    $region24: #{tpu_custom_call.1} parent=1 // pred_region
      %s359 = ssub.s32 1024, 1024
      %360 = vsyncadd [#allocation4], %s359
      %s361 = sshll.u32 [#allocation7], 4
      %s362 = int_to_ptr.vmem [resolvable:$true] %s361
      %367 = dma.vmem_to_hbm [thread:$0]  %s362, 1024, %s3, [#allocation4], 64, 64, 4
    $region25: #{tpu_custom_call.1} parent=1 // pred_fallthru
      _
    // Predicated region
    $region26: #{tpu_custom_call.1} parent=1 // pred_check
      _
    $region27: #{tpu_custom_call.1} parent=1 // pred_check_branch
      %369 = sbr.rel (0) target = $region29
    $region28: #{tpu_custom_call.1} parent=1 // pred_region
      %370 = dma.done [#allocation4], 1024
    $region29: #{tpu_custom_call.1} parent=1 // pred_fallthru
      _
    %371 = vsyncpa [#allocation3], 1
    %372 = vsyncpa [#allocation6], 1
    %373 = vsyncpa [#allocation4], 1

</llo_original>
